<compile_context>
chip_gen: v5e
topology: v5e:2x2
jax: 0.10.0
libtpu: 0.0.40
codegen_flags: <defaults>
</compile_context>

<pallas_src>
import jax
import jax.numpy as jnp
from jax.experimental import pallas as pl
from jax.experimental.pallas import tpu as pltpu

_LANE = 128
_SUBLANE = 8


def _field_loss_kernel(v_ref, pred_ref, targ_ref, out_ref, acc_ref):
    j = pl.program_id(1)                 # row-slab index within this part

    @pl.when(j == 0)
    def _():
        acc_ref[...] = jnp.zeros_like(acc_ref)

    # Hot path: in-kernel cast, subtract, sublane-fold into the fixed (1, D)
    # f32 accumulator.  v is NOT touched here (hoisted to the epilogue), so
    # the loop is pure cast/sub/reduce/add over the streamed slab.
    diff = pred_ref[...].astype(jnp.float32) - targ_ref[...].astype(jnp.float32)
    acc_ref[...] += jnp.sum(diff, axis=0, keepdims=True)

    # Epilogue (once per part): dot with v + the single cross-lane reduction.
    @pl.when(j == pl.num_programs(1) - 1)
    def _():
        part = jnp.sum(acc_ref[...] * v_ref[...].astype(jnp.float32),
                       axis=(0, 1), keepdims=True)            # (1, 1)
        out_ref[...] = jnp.broadcast_to(part, out_ref.shape)


def _chip_config():
    """Per-generation defaults: core split, per-step block budget, VMEM cap."""
    kind = ""
    try:
        kind = jax.devices()[0].device_kind.lower()
    except Exception:
        pass
    if "v7" in kind:
        # 2 TCs, 64 MiB VMEM/TC, ~3.2 TB/s HBM: big blocks, tight VMEM cap.
        return dict(n_cores=2, block_bytes=12 << 20, vmem_cap=52 << 20)
    if "v6" in kind:
        # 1 TC, 128 MiB VMEM, ~1.4 TB/s: ~8 MiB per stream per step.
        return dict(n_cores=1, block_bytes=16 << 20, vmem_cap=96 << 20)
    if "v4" in kind or ("v5" in kind and "lite" not in kind and "v5e" not in kind):
        # v4 / v5p megacore: 2 TCs, 128 MiB VMEM.
        return dict(n_cores=2, block_bytes=16 << 20, vmem_cap=96 << 20)
    # v5e / unknown single-TC chip: 1 TC, 128 MiB VMEM, ~0.8 TB/s.
    return dict(n_cores=1, block_bytes=12 << 20, vmem_cap=64 << 20)


def _divisors_desc(n):
    ds = set()
    i = 1
    while i * i <= n:
        if n % i == 0:
            ds.add(i)
            ds.add(n // i)
        i += 1
    return sorted(ds, reverse=True)


def _plan(B, D, pred_itemsize, targ_itemsize, v_itemsize, cfg,
          split_bytes, force_parts):
    """Pick (n_parts, n_row_tiles, tile_b, vmem_need); None -> JAX fallback."""
    row_bytes = D * (pred_itemsize + targ_itemsize)   # both streams, one row
    total_bytes = B * row_bytes
    block_bytes = cfg["block_bytes"]                  # combined, per grid step
    vmem_cap = cfg["vmem_cap"]

    if force_parts is not None:
        n_parts = int(force_parts)
    elif cfg["n_cores"] > 1 and total_bytes >= split_bytes:
        n_parts = cfg["n_cores"]
    else:
        n_parts = 1
    if n_parts > 1 and B % (n_parts * _SUBLANE) != 0:
        n_parts = 1                                   # cannot split cleanly
    b_part = B // n_parts

    def vmem_need(tb):
        return (2 * tb * row_bytes                    # 2 pipeline bufs x 2 streams
                + 2 * D * v_itemsize                  # resident v (double buffered)
                + D * 4                               # (1, D) f32 accumulator
                + n_parts * _SUBLANE * _LANE * 4 * 2  # output blocks
                + (2 << 20))                          # headroom / internal scratch

    # Whole-part row slab in a single block (grid (1, 1)) when it fits, or
    # when B is not a multiple of 8 (only a full-dim block is then legal).
    if n_parts == 1 and (B * row_bytes <= block_bytes or B % _SUBLANE != 0):
        if vmem_need(B) <= vmem_cap:
            return 1, 1, B, vmem_need(B)
        if B % _SUBLANE != 0:
            return None
    if b_part % _SUBLANE != 0:
        return None

    # Tiled path: tile_b must divide b_part and be a multiple of 8 (sublane rule).
    for f in _divisors_desc(b_part // _SUBLANE):
        tb = f * _SUBLANE
        if tb * row_bytes <= block_bytes and vmem_need(tb) <= vmem_cap:
            return n_parts, b_part // tb, tb, vmem_need(tb)
    tb = _SUBLANE                                      # last resort: 8-row slabs
    if vmem_need(tb) <= vmem_cap:
        return n_parts, b_part // tb, tb, vmem_need(tb)
    return None


def _field_loss_jax(v2d, pred2d, targ2d, B):
    diff = pred2d.astype(jnp.float32) - targ2d.astype(jnp.float32)
    avg = jnp.sum(jnp.sum(diff, axis=0) * v2d[0].astype(jnp.float32))
    avg = avg / jnp.float32(B)
    return -avg * avg


def field_loss(class2target_v_a, model_pred_latents, model_target_latents, *,
               block_bytes=None, split_bytes=4 << 20,
               min_pallas_bytes=1 << 20, force_parts=None):
    """Pallas implementation of FieldLoss.forward. Returns a scalar f32."""
    v = class2target_v_a.reshape(1, -1)
    D = v.shape[1]
    total = model_pred_latents.size
    if D == 0 or total % D != 0:
        raise ValueError(
            f"pred numel ({total}) must be a multiple of len(v) ({D})")
    B = total // D

    # Native dtype, contiguous reshape only (no wrapper-side astype copies of
    # the big streamed tensors).
    pred2d = model_pred_latents.reshape(B, D)
    targ2d = model_target_latents.reshape(B, D)

    stream_bytes = (pred2d.size * jnp.dtype(pred2d.dtype).itemsize
                    + targ2d.size * jnp.dtype(targ2d.dtype).itemsize)
    if stream_bytes < min_pallas_bytes and force_parts is None:
        # Tiny problems are launch-latency bound: skip the kernel entirely.
        return _field_loss_jax(v, pred2d, targ2d, B)

    cfg = _chip_config()
    if block_bytes is not None:
        cfg = dict(cfg, block_bytes=int(block_bytes))

    plan = _plan(B, D,
                 jnp.dtype(pred2d.dtype).itemsize,
                 jnp.dtype(targ2d.dtype).itemsize,
                 jnp.dtype(v.dtype).itemsize,
                 cfg, split_bytes, force_parts)
    if plan is None:
        # TODO(synk): shapes that cannot be tiled cleanly (B not a multiple of
        # 8 and too large for a single VMEM slab, or D so large that resident
        # v alone overflows VMEM) fall back to XLA; a v-streaming / D-tiled
        # variant would cover them.
        return _field_loss_jax(v, pred2d, targ2d, B)

    n_parts, n_tiles, tile_b, vmem_need = plan
    vmem_limit = int(min(cfg["vmem_cap"], max(vmem_need, 16 << 20)))

    out = pl.pallas_call(
        _field_loss_kernel,
        out_shape=jax.ShapeDtypeStruct((n_parts * _SUBLANE, _LANE), jnp.float32),
        grid_spec=pltpu.PrefetchScalarGridSpec(
            num_scalar_prefetch=0,
            grid=(n_parts, n_tiles),
            in_specs=[
                pl.BlockSpec((1, D), lambda p, j: (0, 0)),               # resident v
                pl.BlockSpec((tile_b, D), lambda p, j: (p * n_tiles + j, 0)),
                pl.BlockSpec((tile_b, D), lambda p, j: (p * n_tiles + j, 0)),
            ],
            out_specs=pl.BlockSpec((_SUBLANE, _LANE), lambda p, j: (p, 0)),
            scratch_shapes=[pltpu.VMEM((1, D), jnp.float32)],
        ),
        compiler_params=pltpu.CompilerParams(
            dimension_semantics=("parallel", "arbitrary"),
            vmem_limit_bytes=vmem_limit),
    )(v, pred2d, targ2d)

    # Tiny scalar tail: combine per-part partial dot sums, /bsz, square, negate.
    partials = out[0::_SUBLANE, 0]                    # (n_parts,)
    avg = jnp.sum(partials) / jnp.float32(B)
    return -avg * avg


def field_loss_ref(class2target_v_a, model_pred_latents, model_target_latents):
    v = class2target_v_a.reshape(-1).astype(jnp.float32)
    D = v.shape[0]
    B = model_pred_latents.size // D
    pred = model_pred_latents.reshape(B, D).astype(jnp.float32)
    targ = model_target_latents.reshape(B, D).astype(jnp.float32)
    avg = jnp.sum((pred - targ) @ v) / B
    return -avg * avg


if __name__ == "__main__":
    # Latent tensor NCHW = [2, 4, 16, 16]; the module flattens it via its
    # bsz = numel // len(v) rule (D = C*H*W = 1024).
    B, C, H, W = 2, 4, 16, 16
    D = C * H * W

    key = jax.random.PRNGKey(0)
    k1, k2, k3, k4, k5 = jax.random.split(key, 5)
    pred = jax.random.normal(k1, (B, C, H, W), dtype=jnp.float32)
    targ = jax.random.normal(k2, (B, C, H, W), dtype=jnp.float32)
    v = jax.random.normal(k3, (D,), dtype=jnp.float32)

    ref = field_loss_ref(v, pred, targ)

    # 1) default path: tiny input takes the pure-JAX (no-Pallas) fast path.
    out0 = jax.block_until_ready(field_loss(v, pred, targ))
    assert jnp.allclose(out0, ref, rtol=1e-4, atol=1e-4), (out0, ref)

    # 2) force the Pallas kernel: single (B, D) row slab, grid (1, 1).
    out1 = jax.block_until_ready(field_loss(v, pred, targ, min_pallas_bytes=0))
    assert jnp.allclose(out1, ref, rtol=1e-4, atol=1e-4), (out1, ref)

    # 3) forced row-tiled + 2-part path (correct on any chip; the "parallel"
    #    axis simply runs serially on single-TC parts): 32 rows, tile_b = 8.
    B2 = 32
    pred2 = jax.random.normal(k4, (B2, D), dtype=jnp.float32)
    targ2 = jax.random.normal(k5, (B2, D), dtype=jnp.float32)
    ref2 = field_loss_ref(v, pred2, targ2)
    out2 = jax.block_until_ready(
        field_loss(v, pred2, targ2, min_pallas_bytes=0, force_parts=2,
                   block_bytes=_SUBLANE * D * 8))     # caps tile_b at 8 rows
    assert jnp.allclose(out2, ref2, rtol=1e-4, atol=1e-4), (out2, ref2)

    # 4) native-bf16 latents streamed directly (in-kernel cast, no wrapper copy).
    pred_bf = pred.astype(jnp.bfloat16)
    targ_bf = targ.astype(jnp.bfloat16)
    ref3 = field_loss_ref(v, pred_bf, targ_bf)
    out3 = jax.block_until_ready(
        field_loss(v, pred_bf, targ_bf, min_pallas_bytes=0))
    assert jnp.allclose(out3, ref3, rtol=2e-2, atol=1e-2), (out3, ref3)

    print("KERNEL_OK")
</pallas_src>

<mosaic_0001>
module attributes {stable_mosaic.version = 11 : i64} {
  func.func @_field_loss_kernel(%arg0: i32, %arg1: i32, %arg2: memref<1x1024xf32, #tpu.memory_space<vmem>>, %arg3: memref<2x1024xf32, #tpu.memory_space<vmem>>, %arg4: memref<2x1024xf32, #tpu.memory_space<vmem>>, %arg5: memref<8x128xf32, #tpu.memory_space<vmem>>, %arg6: memref<1x1024xf32, #tpu.memory_space<vmem>>) attributes {dimension_semantics = [#tpu.dimension_semantics<parallel>, #tpu.dimension_semantics<arbitrary>], iteration_bounds = array<i64: 1, 1>, scalar_prefetch = 0 : i64, scratch_operands = 1 : i64, tpu.core_type = #tpu.core_type<tc>, window_params = [{pipeline_mode = #tpu.pipeline_mode<synchronous>, transform_indices = @transform_0, window_bounds = array<i64: 1, 1024>}, {transform_indices = @transform_1, window_bounds = array<i64: 2, 1024>}, {transform_indices = @transform_2, window_bounds = array<i64: 2, 1024>}, {transform_indices = @transform_3, window_bounds = array<i64: 8, 128>}]} {
    %c0_i32 = arith.constant 0 : i32
    %0 = arith.cmpi eq, %arg1, %c0_i32 : i32
    %1 = arith.extui %0 : i1 to i32
    %c0_i32_0 = arith.constant 0 : i32
    %2 = arith.cmpi ne, %1, %c0_i32_0 : i32
    scf.if %2 {
      %cst_10 = arith.constant 0.000000e+00 : f32
      %14 = vector.broadcast %cst_10 : f32 to vector<1x1024xf32>
      %c0_11 = arith.constant 0 : index
      %c0_12 = arith.constant 0 : index
      %15 = vector.load %arg6[%c0_11, %c0_12] : memref<1x1024xf32, #tpu.memory_space<vmem>>, vector<1x1024xf32>
      tpu.vector_store %arg6[%c0_11, %c0_12], %14 {strides = array<i32>} : memref<1x1024xf32, #tpu.memory_space<vmem>>, vector<1x1024xf32>,
    } else {
    }
    %c0 = arith.constant 0 : index
    %c0_1 = arith.constant 0 : index
    %3 = vector.load %arg3[%c0, %c0_1] : memref<2x1024xf32, #tpu.memory_space<vmem>>, vector<2x1024xf32>
    %c0_2 = arith.constant 0 : index
    %c0_3 = arith.constant 0 : index
    %4 = vector.load %arg4[%c0_2, %c0_3] : memref<2x1024xf32, #tpu.memory_space<vmem>>, vector<2x1024xf32>
    %5 = arith.subf %3, %4 : vector<2x1024xf32>
    %c0_4 = arith.constant 0 : index
    %c0_5 = arith.constant 0 : index
    %6 = vector.load %arg6[%c0_4, %c0_5] : memref<1x1024xf32, #tpu.memory_space<vmem>>, vector<1x1024xf32>
    %cst = arith.constant dense<0.000000e+00> : vector<1024xf32>
    %7 = vector.multi_reduction <add>, %5, %cst [0] : vector<2x1024xf32> to vector<1024xf32>
    %8 = vector.shape_cast %7 : vector<1024xf32> to vector<1x1024xf32>
    %9 = arith.addf %6, %8 : vector<1x1024xf32>
    %c0_6 = arith.constant 0 : index
    %c0_7 = arith.constant 0 : index
    %10 = vector.load %arg6[%c0_6, %c0_7] : memref<1x1024xf32, #tpu.memory_space<vmem>>, vector<1x1024xf32>
    tpu.vector_store %arg6[%c0_6, %c0_7], %9 {strides = array<i32>} : memref<1x1024xf32, #tpu.memory_space<vmem>>, vector<1x1024xf32>,
    %c0_i32_8 = arith.constant 0 : i32
    %11 = arith.cmpi eq, %arg1, %c0_i32_8 : i32
    %12 = arith.extui %11 : i1 to i32
    %c0_i32_9 = arith.constant 0 : i32
    %13 = arith.cmpi ne, %12, %c0_i32_9 : i32
    scf.if %13 {
      %c0_10 = arith.constant 0 : index
      %c0_11 = arith.constant 0 : index
      %14 = vector.load %arg6[%c0_10, %c0_11] : memref<1x1024xf32, #tpu.memory_space<vmem>>, vector<1x1024xf32>
      %c0_12 = arith.constant 0 : index
      %c0_13 = arith.constant 0 : index
      %15 = vector.load %arg2[%c0_12, %c0_13] : memref<1x1024xf32, #tpu.memory_space<vmem>>, vector<1x1024xf32>
      %16 = arith.mulf %14, %15 : vector<1x1024xf32>
      %17 = vector.shape_cast %16 : vector<1x1024xf32> to vector<1x1x1024xf32>
      %cst_14 = arith.constant dense<0.000000e+00> : vector<1xf32>
      %18 = vector.multi_reduction <add>, %17, %cst_14 [1, 2] : vector<1x1x1024xf32> to vector<1xf32>
      %19 = vector.shape_cast %18 : vector<1xf32> to vector<1x1x1xf32>
      %20 = vector.extract %19[0, 0, 0] : f32 from vector<1x1x1xf32>
      %21 = vector.broadcast %20 : f32 to vector<1x1xf32>
      %22 = vector.shape_cast %21 : vector<1x1xf32> to vector<1x1xf32>
      %23 = vector.broadcast %22 : vector<1x1xf32> to vector<8x128xf32>
      %c0_15 = arith.constant 0 : index
      %c0_16 = arith.constant 0 : index
      %24 = vector.load %arg5[%c0_15, %c0_16] : memref<8x128xf32, #tpu.memory_space<vmem>>, vector<8x128xf32>
      tpu.vector_store %arg5[%c0_15, %c0_16], %23 {strides = array<i32>} : memref<8x128xf32, #tpu.memory_space<vmem>>, vector<8x128xf32>,
    } else {
    }
    return
  }
  func.func @transform_0(%arg0: i32, %arg1: i32) -> (i32, i32) {
    %c0_i32 = arith.constant 0 : i32
    %c0_i32_0 = arith.constant 0 : i32
    %c0_i32_1 = arith.constant 0 : i32
    return %c0_i32, %c0_i32_0 : i32, i32
  }
  func.func @transform_1(%arg0: i32, %arg1: i32) -> (i32, i32) {
    %c1_i32 = arith.constant 1 : i32
    %0 = arith.muli %arg0, %c1_i32 : i32
    %1 = arith.addi %0, %arg1 : i32
    %c0_i32 = arith.constant 0 : i32
    %c0_i32_0 = arith.constant 0 : i32
    return %1, %c0_i32 : i32, i32
  }
  func.func @transform_2(%arg0: i32, %arg1: i32) -> (i32, i32) {
    %c1_i32 = arith.constant 1 : i32
    %0 = arith.muli %arg0, %c1_i32 : i32
    %1 = arith.addi %0, %arg1 : i32
    %c0_i32 = arith.constant 0 : i32
    %c0_i32_0 = arith.constant 0 : i32
    return %1, %c0_i32 : i32, i32
  }
  func.func @transform_3(%arg0: i32, %arg1: i32) -> (i32, i32) {
    %c0_i32 = arith.constant 0 : i32
    %c0_i32_0 = arith.constant 0 : i32
    return %arg0, %c0_i32 : i32, i32
  }
}

</mosaic_0001>

<llo_original>
// kernel: tpu_custom_call.1
$region0: #{tpu_custom_call.1}
  #allocation0 [shape = 'u32[]', space=smem, size = 0x4, offset = 0x4, fixed_abs, tag = 'smem constant byte address 0x4 - core index']
  #allocation1 [shape = 'u32[72,128]{1,0:T(1,128)}', space=vmem, size = 0x9000, scoped, tag = 'internal scratch']
  #allocation2 [shape = 'f32[1,1024]{1,0:T(1,128)}', space=vmem, size = 0x1000, scoped, tag = 'scratch operand']
  %s0 = inlined_call_operand.hbm [shape: f32[1,1024], index: 0, kind: input, shape index: {}]
  %s1 = inlined_call_operand.hbm [shape: f32[2,1024], index: 1, kind: input, shape index: {}]
  %s2 = inlined_call_operand.hbm [shape: f32[2,1024], index: 2, kind: input, shape index: {}]
  %s3 = inlined_call_operand.hbm [shape: f32[8,128], index: 3, kind: output, shape index: {}]
  %s4 = sld [smem:[#allocation0]]
  $region42: #{tpu_custom_call.1} parent=0
    _
  %s6 = ssub.s32 1, %s4
  %s7 = scalar_select 0, %s6, %s4
  $region1: #{tpu_custom_call.1} parent=0
    #allocation3 [shape = 'u8[4096]{0}', space=vmem, size = 0x1000, scoped, tag = 'input window, operand 0, single buffered']
    #allocation4 [shape = 's32[1]{0}', space=sflag, size = 0x4, scoped, tag = 'scoped memory for tpu_custom_call.1']
    #allocation5 [shape = 's32[1]{0}', space=sflag, size = 0x4, scoped, tag = 'scoped memory for tpu_custom_call.1']
    #allocation6 [shape = 'u8[8192]{0}', space=vmem, size = 0x2000, scoped, tag = 'input window, operand 1, single buffered']
    #allocation7 [shape = 's32[1]{0}', space=sflag, size = 0x4, scoped, tag = 'scoped memory for tpu_custom_call.1']
    #allocation8 [shape = 'u8[8192]{0}', space=vmem, size = 0x2000, scoped, tag = 'input window, operand 2, single buffered']
    #allocation9 [shape = 'u8[4096]{0}', space=vmem, size = 0x1000, scoped, tag = 'output window, operand 0, single buffered']
    %8 = vsyncpa [#allocation4], 0
    %9 = vsyncpa [#allocation7], 0
    %10 = vsyncpa [#allocation5], 0
    // Predicated region
    $region2: #{tpu_custom_call.1} parent=1 // pred_check
      _
    $region3: #{tpu_custom_call.1} parent=1 // pred_check_branch
      %12 = sbr.rel (0) target = $region5
    $region4: #{tpu_custom_call.1} parent=1 // pred_region
      %14 = vsyncadd [#allocation4], 0
      %s16 = sshll.u32 %s0, 4
      %s17 = int_to_ptr.hbm [resolvable:$true] %s16
      %s18 = sshll.u32 [#allocation3], 4
      %s19 = int_to_ptr.vmem [resolvable:$true] %s18
      %21 = dma.hbm_to_vmem [thread:$0]  %s17, 128, %s19, [#allocation4]
    $region5: #{tpu_custom_call.1} parent=1 // pred_fallthru
      _
    // Predicated region
    $region6: #{tpu_custom_call.1} parent=1 // pred_check
      _
    $region7: #{tpu_custom_call.1} parent=1 // pred_check_branch
      %23 = sbr.rel (0) target = $region9
    $region8: #{tpu_custom_call.1} parent=1 // pred_region
      %s24 = sadd.s32 0, 0
      %26 = vsyncadd [#allocation7], 0
      %s27 = smul.addr %s24, 8
      %s28 = smul.addr %s27, 2
      %s29 = scalar_lea.hbm %s1, %s28
      %s31 = sshll.u32 %s29, 4
      %s32 = int_to_ptr.hbm [resolvable:$true] %s31
      %s33 = sshll.u32 [#allocation6], 4
      %s34 = int_to_ptr.vmem [resolvable:$true] %s33
      %36 = dma.hbm_to_vmem [thread:$0]  %s32, 256, %s34, [#allocation7]
    $region9: #{tpu_custom_call.1} parent=1 // pred_fallthru
      _
    // Predicated region
    $region10: #{tpu_custom_call.1} parent=1 // pred_check
      _
    $region11: #{tpu_custom_call.1} parent=1 // pred_check_branch
      %38 = sbr.rel (0) target = $region13
    $region12: #{tpu_custom_call.1} parent=1 // pred_region
      %s39 = sadd.s32 0, 0
      %41 = vsyncadd [#allocation7], 0
      %s42 = smul.addr %s39, 8
      %s43 = smul.addr %s42, 2
      %s44 = scalar_lea.hbm %s2, %s43
      %s46 = sshll.u32 %s44, 4
      %s47 = int_to_ptr.hbm [resolvable:$true] %s46
      %s48 = sshll.u32 [#allocation8], 4
      %s49 = int_to_ptr.vmem [resolvable:$true] %s48
      %51 = dma.hbm_to_vmem [thread:$0]  %s47, 256, %s49, [#allocation7]
    $region13: #{tpu_custom_call.1} parent=1 // pred_fallthru
      _
    // Predicated region
    $region14: #{tpu_custom_call.1} parent=1 // pred_check
      _
    $region15: #{tpu_custom_call.1} parent=1 // pred_check_branch
      %53 = sbr.rel (0) target = $region17
    $region16: #{tpu_custom_call.1} parent=1 // pred_region
      %55 = dma.done [#allocation4], 128
    $region17: #{tpu_custom_call.1} parent=1 // pred_fallthru
      _
    // Predicated region
    $region18: #{tpu_custom_call.1} parent=1 // pred_check
      _
    $region19: #{tpu_custom_call.1} parent=1 // pred_check_branch
      %57 = sbr.rel (0) target = $region21
    $region20: #{tpu_custom_call.1} parent=1 // pred_region
      %59 = dma.done [#allocation7], 256
    $region21: #{tpu_custom_call.1} parent=1 // pred_fallthru
      _
    // Predicated region
    $region22: #{tpu_custom_call.1} parent=1 // pred_check
      _
    $region23: #{tpu_custom_call.1} parent=1 // pred_check_branch
      %61 = sbr.rel (0) target = $region25
    $region24: #{tpu_custom_call.1} parent=1 // pred_region
      %63 = dma.done [#allocation7], 256
    $region25: #{tpu_custom_call.1} parent=1 // pred_fallthru
      _
    %s64 = sadd.s32 0, 0
    %s65 = sadd.s32 0, 0
    %p66 = scmp.eq.s32.totalorder 0, 0
    // Predicated region
    $region26: #{tpu_custom_call.1} parent=1 // pred_check
      %p67 = pneg %p66
    $region27: #{tpu_custom_call.1} parent=1 // pred_check_branch
      %69 = sbr.rel (%p67) target = $region29
    $region28: #{tpu_custom_call.1} parent=1 // pred_region
      %70 = vst [vmem:[#allocation2] sm:$0xff] 0.0
    $region29: #{tpu_custom_call.1} parent=1 // pred_fallthru
      _
    %v71 = vld [vmem:[#allocation6] sm:$0xff]
    %v72 = vld [vmem:[#allocation6 + $0x8] sm:$0xff]
    %v73 = vld [vmem:[#allocation8] sm:$0xff]
    %v74 = vld [vmem:[#allocation8 + $0x8] sm:$0xff]
    %v75 = vsub.f32 %v71, %v73
    %v76 = vsub.f32 %v72, %v74
    %v77 = vld [vmem:[#allocation2] sm:$0xff]
    %80 = vst [vmem:[#allocation1] ss:$4 sm:$0xff] %v75
    %s81 = scalar_lea.vmem [#allocation1], 32
    %82 = vst [vmem:[%s81] ss:$4 sm:$0xff] %v76
    %v83 = vld.sshfl [vmem:[#allocation1] sm:$0xff pattern:$0x73625140]
    %v84 = vld.sshfl [vmem:[#allocation1 + $0x8] sm:$0xff pattern:$0x73625140]
    %v85 = vld.sshfl [vmem:[#allocation1 + $0x10] sm:$0xff pattern:$0x73625140]
    %v86 = vld.sshfl [vmem:[#allocation1 + $0x18] sm:$0xff pattern:$0x73625140]
    %v87 = vld.sshfl [vmem:[#allocation1 + $0x20] sm:$0xff pattern:$0x73625140]
    %v88 = vld.sshfl [vmem:[#allocation1 + $0x28] sm:$0xff pattern:$0x73625140]
    %v89 = vld.sshfl [vmem:[#allocation1 + $0x30] sm:$0xff pattern:$0x73625140]
    %v90 = vld.sshfl [vmem:[#allocation1 + $0x38] sm:$0xff pattern:$0x73625140]
    %vm99 = vcmask 1041408
    %v100 = vsel %vm99, %v83, 0.0
    %v101 = vrot.slane %v100, 4
    %v102 = vadd.f32 %v100, %v101
    %v103 = vrot.slane %v102, 2
    %v104 = vadd.f32 %v102, %v103
    %v105 = vrot.slane %v104, 1
    %v106 = vadd.f32 %v104, %v105
    %v107 = vsel %vm99, %v84, 0.0
    %v108 = vrot.slane %v107, 4
    %v109 = vadd.f32 %v107, %v108
    %v110 = vrot.slane %v109, 2
    %v111 = vadd.f32 %v109, %v110
    %v112 = vrot.slane %v111, 1
    %v113 = vadd.f32 %v111, %v112
    %v114 = vsel %vm99, %v85, 0.0
    %v115 = vrot.slane %v114, 4
    %v116 = vadd.f32 %v114, %v115
    %v117 = vrot.slane %v116, 2
    %v118 = vadd.f32 %v116, %v117
    %v119 = vrot.slane %v118, 1
    %v120 = vadd.f32 %v118, %v119
    %v121 = vsel %vm99, %v86, 0.0
    %v122 = vrot.slane %v121, 4
    %v123 = vadd.f32 %v121, %v122
    %v124 = vrot.slane %v123, 2
    %v125 = vadd.f32 %v123, %v124
    %v126 = vrot.slane %v125, 1
    %v127 = vadd.f32 %v125, %v126
    %v128 = vsel %vm99, %v87, 0.0
    %v129 = vrot.slane %v128, 4
    %v130 = vadd.f32 %v128, %v129
    %v131 = vrot.slane %v130, 2
    %v132 = vadd.f32 %v130, %v131
    %v133 = vrot.slane %v132, 1
    %v134 = vadd.f32 %v132, %v133
    %v135 = vsel %vm99, %v88, 0.0
    %v136 = vrot.slane %v135, 4
    %v137 = vadd.f32 %v135, %v136
    %v138 = vrot.slane %v137, 2
    %v139 = vadd.f32 %v137, %v138
    %v140 = vrot.slane %v139, 1
    %v141 = vadd.f32 %v139, %v140
    %v142 = vsel %vm99, %v89, 0.0
    %v143 = vrot.slane %v142, 4
    %v144 = vadd.f32 %v142, %v143
    %v145 = vrot.slane %v144, 2
    %v146 = vadd.f32 %v144, %v145
    %v147 = vrot.slane %v146, 1
    %v148 = vadd.f32 %v146, %v147
    %v149 = vsel %vm99, %v90, 0.0
    %v150 = vrot.slane %v149, 4
    %v151 = vadd.f32 %v149, %v150
    %v152 = vrot.slane %v151, 2
    %v153 = vadd.f32 %v151, %v152
    %v154 = vrot.slane %v153, 1
    %v155 = vadd.f32 %v153, %v154
    %v164 = vrot.slane %v113, 7
    %v165 = vrot.slane %v120, 6
    %v166 = vrot.slane %v127, 5
    %v167 = vrot.slane %v134, 4
    %v168 = vrot.slane %v141, 3
    %v169 = vrot.slane %v148, 2
    %v170 = vrot.slane %v155, 1
    %vm171 = vcmask 1040384
    %v172 = vsel %vm171, %v106, %v164
    %vm173 = vcmask 1042434
    %v174 = vsel %vm173, %v165, %v166
    %v175 = vsel %vm99, %v172, %v174
    %vm176 = vcmask 1044484
    %v177 = vsel %vm176, %v167, %v168
    %vm178 = vcmask 1046534
    %v179 = vsel %vm178, %v169, %v170
    %vm180 = vcmask 1045508
    %v181 = vsel %vm180, %v177, %v179
    %vm182 = vcmask 1043456
    %v183 = vsel %vm182, %v175, %v181
    %v185 = vadd.f32 %v77, %v183
    %186 = vst [vmem:[#allocation2] sm:$0xff] %v185
    // Predicated region
    $region30: #{tpu_custom_call.1} parent=1 // pred_check
      %p187 = pneg %p66
    $region31: #{tpu_custom_call.1} parent=1 // pred_check_branch
      %189 = sbr.rel (%p187) target = $region33
    $region32: #{tpu_custom_call.1} parent=1 // pred_region
      %v190 = vld [vmem:[#allocation2] sm:$0xff]
      %v191 = vld [vmem:[#allocation3] sm:$0xff]
      %v192 = vmul.f32 %v190, %v191
      %v194 = vperm.slane %v192, 0
      %v195 = vperm.slane %v192, 1
      %v196 = vperm.slane %v192, 2
      %v197 = vperm.slane %v192, 3
      %v198 = vperm.slane %v192, 4
      %v199 = vperm.slane %v192, 5
      %v200 = vperm.slane %v192, 6
      %v201 = vperm.slane %v192, 7
      %v210 = vsel %vm171, %v194, 0.0
      %v211 = vsel %vm171, %v195, 0.0
      %v212 = vadd.f32 %v210, %v211
      %v213 = vsel %vm171, %v196, 0.0
      %v214 = vadd.f32 %v212, %v213
      %v215 = vsel %vm171, %v197, 0.0
      %v216 = vadd.f32 %v214, %v215
      %v217 = vsel %vm171, %v198, 0.0
      %v218 = vadd.f32 %v216, %v217
      %v219 = vsel %vm171, %v199, 0.0
      %v220 = vadd.f32 %v218, %v219
      %v221 = vsel %vm171, %v200, 0.0
      %v222 = vadd.f32 %v220, %v221
      %v223 = vsel %vm171, %v201, 0.0
      %v224 = vadd.f32 %v222, %v223
      %225 = vadd.xlane.f32.xlu0 %v224
      %v226 = vpop.xlane.xlu0 %225
      %v227 = vrot.slane %v226, 4
      %v228 = vadd.f32 %v226, %v227
      %v229 = vrot.slane %v228, 2
      %v230 = vadd.f32 %v228, %v229
      %v231 = vrot.slane %v230, 1
      %v232 = vadd.f32 %v230, %v231
      %s233 = vtos %v232
      %v234 = vstv %s233
      %235 = vst [vmem:[#allocation9] sm:$0xff] %v234
    $region33: #{tpu_custom_call.1} parent=1 // pred_fallthru
      _
    // Predicated region
    $region34: #{tpu_custom_call.1} parent=1 // pred_check
      _
    $region35: #{tpu_custom_call.1} parent=1 // pred_check_branch
      %237 = sbr.rel (0) target = $region37
    $region36: #{tpu_custom_call.1} parent=1 // pred_region
      %239 = vsyncadd [#allocation5], 0
      %s241 = sshll.u32 [#allocation9], 4
      %s242 = int_to_ptr.vmem [resolvable:$true] %s241
      %s243 = sshll.u32 %s3, 4
      %s244 = int_to_ptr.hbm [resolvable:$true] %s243
      %246 = dma.vmem_to_hbm [thread:$0]  %s242, 128, %s244, [#allocation5]
    $region37: #{tpu_custom_call.1} parent=1 // pred_fallthru
      _
    // Predicated region
    $region38: #{tpu_custom_call.1} parent=1 // pred_check
      _
    $region39: #{tpu_custom_call.1} parent=1 // pred_check_branch
      %248 = sbr.rel (0) target = $region41
    $region40: #{tpu_custom_call.1} parent=1 // pred_region
      %250 = dma.done [#allocation5], 128
    $region41: #{tpu_custom_call.1} parent=1 // pred_fallthru
      _
    %251 = vsyncpa [#allocation4], 1
    %252 = vsyncpa [#allocation7], 1
    %253 = vsyncpa [#allocation5], 1

</llo_original>
